<compile_context>
chip_gen: v7x
topology: tpu7x:2x2x1
jax: 0.10.0
libtpu: 0.0.40
codegen_flags: <defaults>
</compile_context>

<pallas_src>
import functools

import jax
import jax.numpy as jnp
from jax.experimental import pallas as pl
from jax.experimental.pallas import tpu as pltpu


def _median(vals):
    """Median of a static list of same-shaped arrays via selection networks.

    Uses the 7-stage median-of-5 / 4-op median-of-3 networks (only needed
    min/max outputs are materialized); falls back to an odd-even transposition
    sort for other window sizes.  For odd K the lower median returned by
    torch.median equals the true median, so value-wise this matches.
    """
    vals = list(vals)
    k = len(vals)
    if k == 1:
        return vals[0]
    if k == 3:
        a, b, c = vals
        a, b = jnp.minimum(a, b), jnp.maximum(a, b)
        b = jnp.minimum(b, c)
        return jnp.maximum(a, b)
    if k == 5:
        v0, v1, v2, v3, v4 = vals
        v0, v1 = jnp.minimum(v0, v1), jnp.maximum(v0, v1)
        v3, v4 = jnp.minimum(v3, v4), jnp.maximum(v3, v4)
        v3 = jnp.maximum(v0, v3)            # v0 dead after this
        v1 = jnp.minimum(v1, v4)            # v4 dead after this
        v1, v2 = jnp.minimum(v1, v2), jnp.maximum(v1, v2)
        v2 = jnp.minimum(v2, v3)            # v3 dead after this
        return jnp.maximum(v1, v2)
    # generic fallback: full odd-even transposition network, lower median
    for _ in range(k):
        for i in range(k - 1):
            lo = jnp.minimum(vals[i], vals[i + 1])
            hi = jnp.maximum(vals[i], vals[i + 1])
            vals[i], vals[i + 1] = lo, hi
    return vals[(k - 1) // 2]


def _hpss_kernel(xm_ref, xt_ref, xb_ref, harm_ref, perc_ref, *, K, TH, HR, T,
                 Wp, power, margin_harm, margin_perc, approx, cancel_z):
    p = (K - 1) // 2
    t = pl.program_id(1)
    xm = xm_ref[0]                                    # (TH, Wp) f32 main strip

    if p > 0:
        # ---- harmonic: median over a (1, K) window along W, zero padded ----
        col = jax.lax.broadcasted_iota(jnp.int32, (TH, Wp), 1)
        taps_h = [xm]
        for s in range(1, p + 1):
            for r in (s, Wp - s):                     # non-negative roll amounts
                rx = pltpu.roll(xm, shift=r, axis=1)
                rc = pltpu.roll(col, shift=r, axis=1)
                d = rc - col
                # In-range taps have |d| == s <= p; wrapped columns have
                # |d| == Wp - s > p (wrapper enforces Wp > 2p) and must read
                # zero (matches F.conv2d zero padding).  Direction agnostic.
                valid = jnp.logical_and(d >= -p, d <= p)
                taps_h.append(jnp.where(valid, rx, jnp.float32(0.0)))
        harm = _median(taps_h)

        # ---- percussive: median over a (K, 1) window along H, zero padded --
        # Halo strips come from dedicated BlockSpecs; at the global top/bottom
        # edge the halo is the conv2d zero padding (scalar-predicate multiply).
        top = xt_ref[0] * (t > 0).astype(jnp.float32)
        bot = xb_ref[0] * (t < T - 1).astype(jnp.float32)
        xe = jnp.concatenate([top, xm, bot], axis=0)  # (TH + 2*HR, Wp)
        taps_p = []
        for j in range(-p, p + 1):
            taps_p.append(xm if j == 0 else xe[HR + j:HR + j + TH, :])
        perc = _median(taps_p)
    else:
        harm = xm
        perc = xm

    # ---- soft masks ---------------------------------------------------------
    tiny = jnp.float32(jnp.finfo(jnp.float32).tiny)
    one = jnp.float32(1.0)

    def recip(v):
        if approx:
            return pl.reciprocal(v, approx=True)      # EUP slot
        return one / v

    int_power = float(power).is_integer() and power >= 1.0
    n_pow = int(power) if int_power else 0

    def ipow(v, n):
        r = v
        for _ in range(n - 1):
            r = r * v
        return r

    def softmask(X, Xr):
        if cancel_z and int_power:
            # (X/Z)^n / ((X/Z)^n + (Xr/Z)^n) == X^n / (X^n + Xr^n)
            num = ipow(X, n_pow)
            den = num + ipow(Xr, n_pow)
            den = jnp.where(den < tiny, one, den)
            return num * recip(den)
        Z = jnp.maximum(X, Xr)
        Z = jnp.where(Z < tiny, one, Z)
        zi = recip(Z)
        if int_power:
            m = ipow(X * zi, n_pow)
            rm = ipow(Xr * zi, n_pow)
        else:
            m = jnp.exp(jnp.float32(power) * jnp.log(X * zi))
            rm = jnp.exp(jnp.float32(power) * jnp.log(Xr * zi))
        return m * recip(m + rm)

    if margin_harm == 1.0 and margin_perc == 1.0:
        # Both softmask calls share Z and the denominator -> exact complement.
        mask_harm = softmask(harm, perc)
        harm_out = xm * mask_harm
        perc_out = xm - harm_out
    else:
        mask_harm = softmask(harm, perc * jnp.float32(margin_harm))
        mask_perc = softmask(perc, harm * jnp.float32(margin_perc))
        harm_out = xm * mask_harm
        perc_out = xm * mask_perc

    harm_ref[0, :, :] = harm_out
    perc_ref[0, :, :] = perc_out


def hpss(S, kernel_size=5, power=2.0, margin=1.0, *, block_h=256,
         use_approx_reciprocal=True, cancel_z_norm=False,
         vmem_budget_bytes=40 * 1024 * 1024):
    """Pallas implementation of HPSS.forward (mask=False path).

    S: (B, C, H, W) non-negative float array (spectrogram magnitudes).
    Returns dict with 'harm_spec' and 'perc_spec', each (B, C, H, W) float32.
    """
    if kernel_size % 2 != 1 or kernel_size < 1:
        raise ValueError("kernel_size must be a positive odd integer")
    if len(S.shape) != 4:
        raise ValueError("expected input of shape (B, C, H, W)")
    if isinstance(margin, (tuple, list)):
        margin_harm, margin_perc = float(margin[0]), float(margin[1])
    else:
        margin_harm = margin_perc = float(margin)
    if margin_harm < 1.0 or margin_perc < 1.0:
        raise ValueError("Margins must be >= 1.0")

    B, C, H, W = S.shape
    K = int(kernel_size)
    p = (K - 1) // 2
    N = B * C

    # Halo rows for the (K, 1) vertical filter: a multiple of 8 covering p.
    HR = 8 if p == 0 else ((p + 7) // 8) * 8

    # Lane-dense W: pad to a multiple of 128 (zero pad == conv2d zero pad on
    # the right edge; left edge handled by in-kernel wrap masks).
    Wp = max(((W + 127) // 128) * 128, 128)
    if p > 0 and Wp <= 2 * p:
        raise ValueError("kernel_size too large for the padded time axis")

    # Frequency-axis tile height: multiple of HR, capped by block_h, clamped
    # near H, then shrunk until the estimated per-step VMEM footprint fits.
    TH = HR
    for cand in (512, 256, 128, 64, 32, 16, 8):
        if cand <= block_h and cand >= HR and cand % HR == 0:
            TH = cand
            break
    H_hr = ((H + HR - 1) // HR) * HR          # H rounded up to a multiple of HR
    if TH > H_hr:
        TH = H_hr

    def _est_bytes(th):
        # double-buffered input blocks + double-buffered output blocks
        # + ~12 live (th, Wp) f32 temporaries
        return 4 * Wp * (2 * (th + 2 * HR) + 2 * 2 * th + 12 * th)

    while TH > HR and _est_bytes(TH) > vmem_budget_bytes:
        TH = max(HR, (TH // 2 // HR) * HR)

    T = -(-H // TH)                            # ceil-div
    H_pad = T * TH
    R = TH // HR
    HB = H_pad // HR

    x = S.astype(jnp.float32).reshape(N, H, W)
    if H_pad != H or Wp != W:
        x = jnp.pad(x, ((0, 0), (0, H_pad - H), (0, Wp - W)))

    kernel = functools.partial(
        _hpss_kernel, K=K, TH=TH, HR=HR, T=T, Wp=Wp, power=float(power),
        margin_harm=margin_harm, margin_perc=margin_perc,
        approx=bool(use_approx_reciprocal), cancel_z=bool(cancel_z_norm))

    est = _est_bytes(TH)
    # Cap at 48 MiB so we leave headroom on v7x (64 MiB physical per TC);
    # v5e/v6e (128 MiB) are fine with the same setting.
    vmem_limit = int(min(max(2 * est, 16 * 1024 * 1024), 48 * 1024 * 1024))
    if est > vmem_limit:       # extreme W: exceed the v7x-safe cap, don't fail
        vmem_limit = int(est + 8 * 1024 * 1024)

    in_specs = [
        # main strip
        pl.BlockSpec((1, TH, Wp), lambda n, t: (n, t, 0)),
        # top halo = last HR rows of the tile above (clamped at t == 0;
        # the kernel zeroes it there to reproduce conv2d's zero padding)
        pl.BlockSpec((1, HR, Wp),
                     lambda n, t: (n, jnp.maximum(t * R - 1, 0), 0)),
        # bottom halo = first HR rows of the tile below (clamped at the end)
        pl.BlockSpec((1, HR, Wp),
                     lambda n, t: (n, jnp.minimum((t + 1) * R, HB - 1), 0)),
    ]
    out_specs = [
        pl.BlockSpec((1, TH, Wp), lambda n, t: (n, t, 0)),
        pl.BlockSpec((1, TH, Wp), lambda n, t: (n, t, 0)),
    ]

    harm_spec, perc_spec = pl.pallas_call(
        kernel,
        out_shape=[
            jax.ShapeDtypeStruct((N, H_pad, Wp), jnp.float32),
            jax.ShapeDtypeStruct((N, H_pad, Wp), jnp.float32),
        ],
        grid=(N, T),
        in_specs=in_specs,
        out_specs=out_specs,
        compiler_params=pltpu.CompilerParams(
            dimension_semantics=("parallel", "parallel"),
            vmem_limit_bytes=vmem_limit),
    )(x, x, x)

    if H_pad != H or Wp != W:
        harm_spec = harm_spec[:, :H, :W]
        perc_spec = perc_spec[:, :H, :W]
    return {"harm_spec": harm_spec.reshape(B, C, H, W),
            "perc_spec": perc_spec.reshape(B, C, H, W)}


def _reference(S, kernel_size=5, power=2.0, margin=1.0):
    """Pure-JAX reference mirroring the PyTorch semantics."""
    B, C, H, W = S.shape
    K = kernel_size
    p = (K - 1) // 2
    S = S.astype(jnp.float32)
    Sp = jnp.pad(S, ((0, 0), (0, 0), (p, p), (p, p)))
    harm_pat = jnp.stack([Sp[:, :, p:p + H, d:d + W] for d in range(K)], axis=2)
    perc_pat = jnp.stack([Sp[:, :, d:d + H, p:p + W] for d in range(K)], axis=2)
    harm = jnp.sort(harm_pat, axis=2)[:, :, (K - 1) // 2]   # lower median
    perc = jnp.sort(perc_pat, axis=2)[:, :, (K - 1) // 2]

    tiny = jnp.finfo(jnp.float32).tiny

    def softmask(X, X_ref):
        Z = jnp.maximum(X, X_ref)
        Z = jnp.where(Z < tiny, 1.0, Z)
        m = (X / Z) ** power
        rm = (X_ref / Z) ** power
        return m / (m + rm)

    mask_harm = softmask(harm, perc * margin)
    mask_perc = softmask(perc, harm * margin)
    return {"harm_spec": S * mask_harm, "perc_spec": S * mask_perc}


if __name__ == "__main__":
    key = jax.random.PRNGKey(0)
    B, C, H, W = 2, 2, 16, 16            # channel=2 per HPSS default
    # non-negative inputs (spectrogram magnitudes), as softmask requires
    S = jax.random.uniform(key, (B, C, H, W), dtype=jnp.float32)

    ref = _reference(S, kernel_size=5, power=2.0, margin=1.0)

    # 1) exact-reciprocal path: tight numerical check against the reference
    out = hpss(S, kernel_size=5, power=2.0, margin=1.0,
               use_approx_reciprocal=False)
    jax.block_until_ready(out["harm_spec"])
    jax.block_until_ready(out["perc_spec"])
    assert jnp.allclose(out["harm_spec"], ref["harm_spec"], atol=1e-5, rtol=1e-5)
    assert jnp.allclose(out["perc_spec"], ref["perc_spec"], atol=1e-5, rtol=1e-5)

    # 2) default optimized path (EUP approximate reciprocals) -> looser tolerance
    out_a = hpss(S, kernel_size=5, power=2.0, margin=1.0)
    jax.block_until_ready(out_a["harm_spec"])
    assert jnp.allclose(out_a["harm_spec"], ref["harm_spec"], atol=2e-2, rtol=2e-2)
    assert jnp.allclose(out_a["perc_spec"], ref["perc_spec"], atol=2e-2, rtol=2e-2)

    # 3) exercise the K=3 median network and a non-unity margin (two softmasks)
    out3 = hpss(S, kernel_size=3, power=2.0, margin=2.0,
                use_approx_reciprocal=False)
    jax.block_until_ready(out3["harm_spec"])
    ref3 = _reference(S, kernel_size=3, power=2.0, margin=2.0)
    assert jnp.allclose(out3["harm_spec"], ref3["harm_spec"], atol=1e-5, rtol=1e-5)
    assert jnp.allclose(out3["perc_spec"], ref3["perc_spec"], atol=1e-5, rtol=1e-5)

    # 4) multi-tile H with forced small tiles: exercises cross-tile halos
    H2 = 32
    S2 = jax.random.uniform(jax.random.PRNGKey(1), (B, C, H2, W),
                            dtype=jnp.float32)
    out4 = hpss(S2, kernel_size=5, power=2.0, margin=1.0,
                use_approx_reciprocal=False, block_h=16)
    jax.block_until_ready(out4["harm_spec"])
    ref4 = _reference(S2, kernel_size=5, power=2.0, margin=1.0)
    assert jnp.allclose(out4["harm_spec"], ref4["harm_spec"], atol=1e-5, rtol=1e-5)
    assert jnp.allclose(out4["perc_spec"], ref4["perc_spec"], atol=1e-5, rtol=1e-5)

    print("KERNEL_OK")
</pallas_src>

<mosaic_0001>
module attributes {stable_mosaic.version = 11 : i64} {
  func.func @_hpss_kernel(%arg0: i32, %arg1: i32, %arg2: memref<1x16x128xf32, #tpu.memory_space<vmem>>, %arg3: memref<1x8x128xf32, #tpu.memory_space<vmem>>, %arg4: memref<1x8x128xf32, #tpu.memory_space<vmem>>, %arg5: memref<1x16x128xf32, #tpu.memory_space<vmem>>, %arg6: memref<1x16x128xf32, #tpu.memory_space<vmem>>) attributes {dimension_semantics = [#tpu.dimension_semantics<parallel>, #tpu.dimension_semantics<parallel>], iteration_bounds = array<i64: 4, 1>, scalar_prefetch = 0 : i64, scratch_operands = 0 : i64, tpu.core_type = #tpu.core_type<tc>, window_params = [{transform_indices = @transform_0, window_bounds = array<i64: 1, 16, 128>}, {transform_indices = @transform_1, window_bounds = array<i64: 1, 8, 128>}, {transform_indices = @transform_2, window_bounds = array<i64: 1, 8, 128>}, {transform_indices = @transform_3, window_bounds = array<i64: 1, 16, 128>}, {transform_indices = @transform_4, window_bounds = array<i64: 1, 16, 128>}]} {
    %c0 = arith.constant 0 : index
    %c0_0 = arith.constant 0 : index
    %c0_1 = arith.constant 0 : index
    %0 = vector.load %arg2[%c0, %c0_0, %c0_1] : memref<1x16x128xf32, #tpu.memory_space<vmem>>, vector<1x16x128xf32>
    %1 = vector.shape_cast %0 : vector<1x16x128xf32> to vector<16x128xf32>
    %2 = tpu.iota {dimensions = array<i32: 1>} : vector<16x128xi32>
    %c1_i32 = arith.constant 1 : i32
    %3 = tpu.dynamic_rotate %1 by %c1_i32 dim 1 : vector<16x128xf32>, i32 -> vector<16x128xf32>
    %c1_i32_2 = arith.constant 1 : i32
    %4 = tpu.dynamic_rotate %2 by %c1_i32_2 dim 1 : vector<16x128xi32>, i32 -> vector<16x128xi32>
    %5 = arith.subi %4, %2 : vector<16x128xi32>
    %c-2_i32 = arith.constant -2 : i32
    %6 = vector.broadcast %c-2_i32 : i32 to vector<16x128xi32>
    %7 = arith.cmpi sge, %5, %6 : vector<16x128xi32>
    %c2_i32 = arith.constant 2 : i32
    %8 = vector.broadcast %c2_i32 : i32 to vector<16x128xi32>
    %9 = arith.cmpi sle, %5, %8 : vector<16x128xi32>
    %10 = arith.andi %7, %9 : vector<16x128xi1>
    %cst = arith.constant 0.000000e+00 : f32
    %11 = vector.broadcast %cst : f32 to vector<16x128xf32>
    %12 = arith.select %10, %3, %11 : vector<16x128xi1>, vector<16x128xf32>
    %c127_i32 = arith.constant 127 : i32
    %13 = tpu.dynamic_rotate %1 by %c127_i32 dim 1 : vector<16x128xf32>, i32 -> vector<16x128xf32>
    %c127_i32_3 = arith.constant 127 : i32
    %14 = tpu.dynamic_rotate %2 by %c127_i32_3 dim 1 : vector<16x128xi32>, i32 -> vector<16x128xi32>
    %15 = arith.subi %14, %2 : vector<16x128xi32>
    %c-2_i32_4 = arith.constant -2 : i32
    %16 = vector.broadcast %c-2_i32_4 : i32 to vector<16x128xi32>
    %17 = arith.cmpi sge, %15, %16 : vector<16x128xi32>
    %c2_i32_5 = arith.constant 2 : i32
    %18 = vector.broadcast %c2_i32_5 : i32 to vector<16x128xi32>
    %19 = arith.cmpi sle, %15, %18 : vector<16x128xi32>
    %20 = arith.andi %17, %19 : vector<16x128xi1>
    %cst_6 = arith.constant 0.000000e+00 : f32
    %21 = vector.broadcast %cst_6 : f32 to vector<16x128xf32>
    %22 = arith.select %20, %13, %21 : vector<16x128xi1>, vector<16x128xf32>
    %c2_i32_7 = arith.constant 2 : i32
    %23 = tpu.dynamic_rotate %1 by %c2_i32_7 dim 1 : vector<16x128xf32>, i32 -> vector<16x128xf32>
    %c2_i32_8 = arith.constant 2 : i32
    %24 = tpu.dynamic_rotate %2 by %c2_i32_8 dim 1 : vector<16x128xi32>, i32 -> vector<16x128xi32>
    %25 = arith.subi %24, %2 : vector<16x128xi32>
    %c-2_i32_9 = arith.constant -2 : i32
    %26 = vector.broadcast %c-2_i32_9 : i32 to vector<16x128xi32>
    %27 = arith.cmpi sge, %25, %26 : vector<16x128xi32>
    %c2_i32_10 = arith.constant 2 : i32
    %28 = vector.broadcast %c2_i32_10 : i32 to vector<16x128xi32>
    %29 = arith.cmpi sle, %25, %28 : vector<16x128xi32>
    %30 = arith.andi %27, %29 : vector<16x128xi1>
    %cst_11 = arith.constant 0.000000e+00 : f32
    %31 = vector.broadcast %cst_11 : f32 to vector<16x128xf32>
    %32 = arith.select %30, %23, %31 : vector<16x128xi1>, vector<16x128xf32>
    %c126_i32 = arith.constant 126 : i32
    %33 = tpu.dynamic_rotate %1 by %c126_i32 dim 1 : vector<16x128xf32>, i32 -> vector<16x128xf32>
    %c126_i32_12 = arith.constant 126 : i32
    %34 = tpu.dynamic_rotate %2 by %c126_i32_12 dim 1 : vector<16x128xi32>, i32 -> vector<16x128xi32>
    %35 = arith.subi %34, %2 : vector<16x128xi32>
    %c-2_i32_13 = arith.constant -2 : i32
    %36 = vector.broadcast %c-2_i32_13 : i32 to vector<16x128xi32>
    %37 = arith.cmpi sge, %35, %36 : vector<16x128xi32>
    %c2_i32_14 = arith.constant 2 : i32
    %38 = vector.broadcast %c2_i32_14 : i32 to vector<16x128xi32>
    %39 = arith.cmpi sle, %35, %38 : vector<16x128xi32>
    %40 = arith.andi %37, %39 : vector<16x128xi1>
    %cst_15 = arith.constant 0.000000e+00 : f32
    %41 = vector.broadcast %cst_15 : f32 to vector<16x128xf32>
    %42 = arith.select %40, %33, %41 : vector<16x128xi1>, vector<16x128xf32>
    %43 = arith.minimumf %1, %12 : vector<16x128xf32>
    %44 = arith.maximumf %1, %12 : vector<16x128xf32>
    %45 = arith.minimumf %32, %42 : vector<16x128xf32>
    %46 = arith.maximumf %32, %42 : vector<16x128xf32>
    %47 = arith.maximumf %43, %45 : vector<16x128xf32>
    %48 = arith.minimumf %44, %46 : vector<16x128xf32>
    %49 = arith.minimumf %48, %22 : vector<16x128xf32>
    %50 = arith.maximumf %48, %22 : vector<16x128xf32>
    %51 = arith.minimumf %50, %47 : vector<16x128xf32>
    %52 = arith.maximumf %49, %51 : vector<16x128xf32>
    %c0_16 = arith.constant 0 : index
    %c0_17 = arith.constant 0 : index
    %c0_18 = arith.constant 0 : index
    %53 = vector.load %arg3[%c0_16, %c0_17, %c0_18] : memref<1x8x128xf32, #tpu.memory_space<vmem>>, vector<1x8x128xf32>
    %54 = vector.shape_cast %53 : vector<1x8x128xf32> to vector<8x128xf32>
    %c0_i32 = arith.constant 0 : i32
    %55 = arith.cmpi sgt, %arg1, %c0_i32 : i32
    %56 = arith.extui %55 : i1 to i32
    %57 = arith.sitofp %56 : i32 to f32
    %58 = vector.broadcast %57 : f32 to vector<8x128xf32>
    %59 = arith.mulf %54, %58 : vector<8x128xf32>
    %c0_19 = arith.constant 0 : index
    %c0_20 = arith.constant 0 : index
    %c0_21 = arith.constant 0 : index
    %60 = vector.load %arg4[%c0_19, %c0_20, %c0_21] : memref<1x8x128xf32, #tpu.memory_space<vmem>>, vector<1x8x128xf32>
    %61 = vector.shape_cast %60 : vector<1x8x128xf32> to vector<8x128xf32>
    %c0_i32_22 = arith.constant 0 : i32
    %62 = arith.cmpi slt, %arg1, %c0_i32_22 : i32
    %63 = arith.extui %62 : i1 to i32
    %64 = arith.sitofp %63 : i32 to f32
    %65 = vector.broadcast %64 : f32 to vector<8x128xf32>
    %66 = arith.mulf %61, %65 : vector<8x128xf32>
    %67 = tpu.concatenate %59, %1, %66 in 0 : vector<8x128xf32>, vector<16x128xf32>, vector<8x128xf32> -> vector<32x128xf32>
    %68 = vector.extract_strided_slice %67 {offsets = [6, 0], sizes = [16, 128], strides = [1, 1]} : vector<32x128xf32> to vector<16x128xf32>
    %69 = vector.extract_strided_slice %67 {offsets = [7, 0], sizes = [16, 128], strides = [1, 1]} : vector<32x128xf32> to vector<16x128xf32>
    %70 = vector.extract_strided_slice %67 {offsets = [9, 0], sizes = [16, 128], strides = [1, 1]} : vector<32x128xf32> to vector<16x128xf32>
    %71 = vector.extract_strided_slice %67 {offsets = [10, 0], sizes = [16, 128], strides = [1, 1]} : vector<32x128xf32> to vector<16x128xf32>
    %72 = arith.minimumf %68, %69 : vector<16x128xf32>
    %73 = arith.maximumf %68, %69 : vector<16x128xf32>
    %74 = arith.minimumf %70, %71 : vector<16x128xf32>
    %75 = arith.maximumf %70, %71 : vector<16x128xf32>
    %76 = arith.maximumf %72, %74 : vector<16x128xf32>
    %77 = arith.minimumf %73, %75 : vector<16x128xf32>
    %78 = arith.minimumf %77, %1 : vector<16x128xf32>
    %79 = arith.maximumf %77, %1 : vector<16x128xf32>
    %80 = arith.minimumf %79, %76 : vector<16x128xf32>
    %81 = arith.maximumf %78, %80 : vector<16x128xf32>
    %82 = arith.maximumf %52, %81 : vector<16x128xf32>
    %cst_23 = arith.constant 1.17549435E-38 : f32
    %83 = vector.broadcast %cst_23 : f32 to vector<16x128xf32>
    %84 = arith.cmpf olt, %82, %83 : vector<16x128xf32>
    %cst_24 = arith.constant 1.000000e+00 : f32
    %85 = vector.broadcast %cst_24 : f32 to vector<16x128xf32>
    %86 = arith.select %84, %85, %82 : vector<16x128xi1>, vector<16x128xf32>
    %cst_25 = arith.constant 1.000000e+00 : f32
    %87 = vector.broadcast %cst_25 : f32 to vector<16x128xf32>
    %88 = arith.divf %87, %86 : vector<16x128xf32>
    %89 = arith.mulf %52, %88 : vector<16x128xf32>
    %90 = arith.mulf %89, %89 : vector<16x128xf32>
    %91 = arith.mulf %81, %88 : vector<16x128xf32>
    %92 = arith.mulf %91, %91 : vector<16x128xf32>
    %93 = arith.addf %90, %92 : vector<16x128xf32>
    %cst_26 = arith.constant 1.000000e+00 : f32
    %94 = vector.broadcast %cst_26 : f32 to vector<16x128xf32>
    %95 = arith.divf %94, %93 : vector<16x128xf32>
    %96 = arith.mulf %90, %95 : vector<16x128xf32>
    %97 = arith.mulf %1, %96 : vector<16x128xf32>
    %98 = arith.subf %1, %97 : vector<16x128xf32>
    %c0_27 = arith.constant 0 : index
    %c0_28 = arith.constant 0 : index
    %c0_29 = arith.constant 0 : index
    %99 = vector.load %arg5[%c0_27, %c0_28, %c0_29] : memref<1x16x128xf32, #tpu.memory_space<vmem>>, vector<1x16x128xf32>
    %100 = vector.shape_cast %99 : vector<1x16x128xf32> to vector<16x128xf32>
    %101 = vector.shape_cast %97 : vector<16x128xf32> to vector<1x16x128xf32>
    tpu.vector_store %arg5[%c0_27, %c0_28, %c0_29], %101 {strides = array<i32>} : memref<1x16x128xf32, #tpu.memory_space<vmem>>, vector<1x16x128xf32>,
    %c0_30 = arith.constant 0 : index
    %c0_31 = arith.constant 0 : index
    %c0_32 = arith.constant 0 : index
    %102 = vector.load %arg6[%c0_30, %c0_31, %c0_32] : memref<1x16x128xf32, #tpu.memory_space<vmem>>, vector<1x16x128xf32>
    %103 = vector.shape_cast %102 : vector<1x16x128xf32> to vector<16x128xf32>
    %104 = vector.shape_cast %98 : vector<16x128xf32> to vector<1x16x128xf32>
    tpu.vector_store %arg6[%c0_30, %c0_31, %c0_32], %104 {strides = array<i32>} : memref<1x16x128xf32, #tpu.memory_space<vmem>>, vector<1x16x128xf32>,
    return
  }
  func.func @transform_0(%arg0: i32, %arg1: i32) -> (i32, i32, i32) {
    %c0_i32 = arith.constant 0 : i32
    %c0_i32_0 = arith.constant 0 : i32
    return %arg0, %arg1, %c0_i32 : i32, i32, i32
  }
  func.func @transform_1(%arg0: i32, %arg1: i32) -> (i32, i32, i32) {
    %c2_i32 = arith.constant 2 : i32
    %0 = arith.muli %arg1, %c2_i32 : i32
    %c1_i32 = arith.constant 1 : i32
    %1 = arith.subi %0, %c1_i32 : i32
    %c0_i32 = arith.constant 0 : i32
    %2 = arith.maxsi %1, %c0_i32 : i32
    %c0_i32_0 = arith.constant 0 : i32
    %c0_i32_1 = arith.constant 0 : i32
    return %arg0, %2, %c0_i32_0 : i32, i32, i32
  }
  func.func @transform_2(%arg0: i32, %arg1: i32) -> (i32, i32, i32) {
    %c1_i32 = arith.constant 1 : i32
    %0 = arith.addi %arg1, %c1_i32 : i32
    %c2_i32 = arith.constant 2 : i32
    %1 = arith.muli %0, %c2_i32 : i32
    %c1_i32_0 = arith.constant 1 : i32
    %2 = arith.minsi %1, %c1_i32_0 : i32
    %c0_i32 = arith.constant 0 : i32
    %c0_i32_1 = arith.constant 0 : i32
    return %arg0, %2, %c0_i32 : i32, i32, i32
  }
  func.func @transform_3(%arg0: i32, %arg1: i32) -> (i32, i32, i32) {
    %c0_i32 = arith.constant 0 : i32
    %c0_i32_0 = arith.constant 0 : i32
    return %arg0, %arg1, %c0_i32 : i32, i32, i32
  }
  func.func @transform_4(%arg0: i32, %arg1: i32) -> (i32, i32, i32) {
    %c0_i32 = arith.constant 0 : i32
    %c0_i32_0 = arith.constant 0 : i32
    return %arg0, %arg1, %c0_i32 : i32, i32, i32
  }
}

</mosaic_0001>

<llo_original>
// kernel: tpu_custom_call.1
$region0: #{tpu_custom_call.1}
  #allocation0 [shape = 'u32[]', space=smem, size = 0x4, offset = 0x4, fixed_abs, tag = 'smem constant byte address 0x4 - core index']
  #allocation1 [shape = 'u32[144,128]{1,0:T(1,128)}', space=vmem, size = 0x12000, scoped, tag = 'internal scratch']
  %s0 = inlined_call_operand.hbm [shape: f32[4,16,128], index: 0, kind: input, shape index: {}]
  %s1 = inlined_call_operand.hbm [shape: f32[4,16,128], index: 1, kind: input, shape index: {}]
  %s2 = inlined_call_operand.hbm [shape: f32[4,16,128], index: 2, kind: input, shape index: {}]
  %s3 = inlined_call_operand.hbm [shape: f32[4,16,128], index: 3, kind: output, shape index: {0}]
  %s4 = inlined_call_operand.hbm [shape: f32[4,16,128], index: 4, kind: output, shape index: {1}]
  %5 = xla_tuple %s3, %s4
  %s6 = sld [smem:[#allocation0]]
  $region65: #{tpu_custom_call.1} parent=0
    _
  %s8 = ssub.s32 1, %s6
  %s9 = scalar_select 0, %s8, %s6
  $region1: #{tpu_custom_call.1} parent=0
    #allocation2 [shape = 'u8[16384]{0}', space=vmem, size = 0x4000, scoped, tag = 'input window, operand 0']
    #allocation3 [shape = 's32[2]{0}', space=sflag, size = 0x8, scoped, tag = 'scoped memory for tpu_custom_call.1']
    #allocation4 [shape = 's32[2]{0}', space=sflag, size = 0x8, scoped, tag = 'scoped memory for tpu_custom_call.1']
    #allocation5 [shape = 'u8[8192]{0}', space=vmem, size = 0x2000, scoped, tag = 'input window, operand 1']
    #allocation6 [shape = 's32[2]{0}', space=sflag, size = 0x8, scoped, tag = 'scoped memory for tpu_custom_call.1']
    #allocation7 [shape = 'u8[8192]{0}', space=vmem, size = 0x2000, scoped, tag = 'input window, operand 2']
    #allocation8 [shape = 'u8[16384]{0}', space=vmem, size = 0x4000, scoped, tag = 'output window, operand 0']
    #allocation9 [shape = 'u8[16384]{0}', space=vmem, size = 0x4000, scoped, tag = 'output window, operand 1']
    #allocation10 [shape = 's32[2]{0}', space=sflag, size = 0x8, scoped, tag = 'scoped memory for tpu_custom_call.1']
    %10 = vsyncpa [#allocation3], 0
    %s11 = scalar_lea.sflag [#allocation3], 1
    %12 = vsyncpa %s11, 0
    %13 = vsyncpa [#allocation6], 0
    %s14 = scalar_lea.sflag [#allocation6], 1
    %15 = vsyncpa %s14, 0
    %16 = vsyncpa [#allocation4], 0
    %s17 = scalar_lea.sflag [#allocation4], 1
    %18 = vsyncpa %s17, 0
    %19 = vsyncpa [#allocation10], 0
    %s20 = scalar_lea.sflag [#allocation10], 1
    %21 = vsyncpa %s20, 0
    loop: start=0, step=1, limit=6
    $region2: #{tpu_custom_call.1} parent=1 // loop_pre_header
      _
    $region3: #{tpu_custom_call.1} parent=1 // loop_header
      %s23 = sphi 0, %s27
      %p24 = scmp.ge.s32.totalorder %s23, 6
      %s30 = sphi 0, %s42
      %s31 = sphi 0, %s38
      %s32 = sphi 0, %s30
      %s33 = sphi 0, %s31
      %s34 = sphi 0, %s32
      %s35 = sphi 0, %s33
      %s47 = sphi 0, %s49
      %s50 = sphi 0, %s47
      %s51 = sphi 0, %s50
      %s67 = sphi 0, %s51
      %s83 = sphi 0, %s85
      %s86 = sphi 0, %s83
      %s87 = sphi 0, %s86
      %s103 = sphi 0, %s87
      %s119 = sphi 0, %s121
      %s122 = sphi 0, %s119
      %s123 = sphi 0, %s122
      %s139 = sphi 0, %s123
      %s147 = sphi 0, %s149
      %s150 = sphi 0, %s147
      %s151 = sphi 0, %s150
      %s167 = sphi 0, %s151
      %s175 = sphi 0, %s177
      %s178 = sphi 0, %s175
      %s179 = sphi 0, %s178
      %s195 = sphi 0, %s179
    $region4: #{tpu_custom_call.1} parent=1 // loop_header_branch
      %26 = sbr.rel (%p24) target = $region8
    $region5: #{tpu_custom_call.1} parent=1 // loop_body
      %s28 = ssub.s32 %s23, 1
      %s29 = ssub.s32 %s23, 2
      %s36 = sadd.s32 1, %s31
      %p37 = scmp.ge.s32.totalorder %s36, 1
      %s38 = scalar_select %p37, 0, %s36
      %s39 = sadd.s32 1, %s30
      %s40 = scalar_select %p37, %s39, %s30
      %p41 = scmp.ge.s32.totalorder %s40, 4
      %s42 = scalar_select %p41, 0, %s40
      %s43 = ssub.s32 %s30, %s42
      %s44 = ssub.s32 %s31, %s38
      %s45 = sor.u32 %s43, %s44
      %p46 = scmp.eq.s32.totalorder %s45, 0
      %s48 = sadd.s32 %s47, 1
      %s49 = scalar_select %p46, %s47, %s48
      %p52 = pneg %p46
      %p53 = scmp.eq.s32.totalorder %s23, 3
      %p54 = por %p52, %p53
      %p55 = scmp.ne.s32.totalorder %s47, %s50
      %p56 = scmp.eq.s32.totalorder %s23, 0
      %p57 = por %p55, %p56
      %p58 = scmp.ne.s32.totalorder %s47, %s50
      %p59 = scmp.eq.s32.totalorder %s28, 3
      %p60 = por %p58, %p59
      %p61 = scmp.ne.s32.totalorder %s50, %s51
      %p62 = scmp.eq.s32.totalorder %s28, 0
      %p63 = por %p61, %p62
      %p64 = scmp.ne.s32.totalorder %s50, %s51
      %p65 = scmp.eq.s32.totalorder %s29, 3
      %p66 = por %p64, %p65
      %p68 = scmp.ne.s32.totalorder %s51, %s67
      %p69 = scmp.eq.s32.totalorder %s29, 0
      %p70 = por %p68, %p69
      %s71 = smul.u32 %s31, 2
      %s72 = ssub.s32 %s71, 1
      %p73 = scmp.gt.s32.totalorder %s72, 0
      %s74 = scalar_select %p73, %s72, 0
      %s75 = smul.u32 %s38, 2
      %s76 = ssub.s32 %s75, 1
      %p77 = scmp.gt.s32.totalorder %s76, 0
      %s78 = scalar_select %p77, %s76, 0
      %s79 = ssub.s32 %s30, %s42
      %s80 = ssub.s32 %s74, %s78
      %s81 = sor.u32 %s79, %s80
      %p82 = scmp.eq.s32.totalorder %s81, 0
      %s84 = sadd.s32 %s83, 1
      %s85 = scalar_select %p82, %s83, %s84
      %p88 = pneg %p82
      %p89 = scmp.eq.s32.totalorder %s23, 3
      %p90 = por %p88, %p89
      %p91 = scmp.ne.s32.totalorder %s83, %s86
      %p92 = scmp.eq.s32.totalorder %s23, 0
      %p93 = por %p91, %p92
      %p94 = scmp.ne.s32.totalorder %s83, %s86
      %p95 = scmp.eq.s32.totalorder %s28, 3
      %p96 = por %p94, %p95
      %p97 = scmp.ne.s32.totalorder %s86, %s87
      %p98 = scmp.eq.s32.totalorder %s28, 0
      %p99 = por %p97, %p98
      %p100 = scmp.ne.s32.totalorder %s86, %s87
      %p101 = scmp.eq.s32.totalorder %s29, 3
      %p102 = por %p100, %p101
      %p104 = scmp.ne.s32.totalorder %s87, %s103
      %p105 = scmp.eq.s32.totalorder %s29, 0
      %p106 = por %p104, %p105
      %s107 = sadd.s32 %s31, 1
      %s108 = smul.u32 %s107, 2
      %p109 = scmp.lt.s32.totalorder %s108, 1
      %s110 = scalar_select %p109, %s108, 1
      %s111 = sadd.s32 %s38, 1
      %s112 = smul.u32 %s111, 2
      %p113 = scmp.lt.s32.totalorder %s112, 1
      %s114 = scalar_select %p113, %s112, 1
      %s115 = ssub.s32 %s30, %s42
      %s116 = ssub.s32 %s110, %s114
      %s117 = sor.u32 %s115, %s116
      %p118 = scmp.eq.s32.totalorder %s117, 0
      %s120 = sadd.s32 %s119, 1
      %s121 = scalar_select %p118, %s119, %s120
      %p124 = pneg %p118
      %p125 = scmp.eq.s32.totalorder %s23, 3
      %p126 = por %p124, %p125
      %p127 = scmp.ne.s32.totalorder %s119, %s122
      %p128 = scmp.eq.s32.totalorder %s23, 0
      %p129 = por %p127, %p128
      %p130 = scmp.ne.s32.totalorder %s119, %s122
      %p131 = scmp.eq.s32.totalorder %s28, 3
      %p132 = por %p130, %p131
      %p133 = scmp.ne.s32.totalorder %s122, %s123
      %p134 = scmp.eq.s32.totalorder %s28, 0
      %p135 = por %p133, %p134
      %p136 = scmp.ne.s32.totalorder %s122, %s123
      %p137 = scmp.eq.s32.totalorder %s29, 3
      %p138 = por %p136, %p137
      %p140 = scmp.ne.s32.totalorder %s123, %s139
      %p141 = scmp.eq.s32.totalorder %s29, 0
      %p142 = por %p140, %p141
      %s143 = ssub.s32 %s30, %s42
      %s144 = ssub.s32 %s31, %s38
      %s145 = sor.u32 %s143, %s144
      %p146 = scmp.eq.s32.totalorder %s145, 0
      %s148 = sadd.s32 %s147, 1
      %s149 = scalar_select %p146, %s147, %s148
      %p152 = pneg %p146
      %p153 = scmp.eq.s32.totalorder %s23, 3
      %p154 = por %p152, %p153
      %p155 = scmp.ne.s32.totalorder %s147, %s150
      %p156 = scmp.eq.s32.totalorder %s23, 0
      %p157 = por %p155, %p156
      %p158 = scmp.ne.s32.totalorder %s147, %s150
      %p159 = scmp.eq.s32.totalorder %s28, 3
      %p160 = por %p158, %p159
      %p161 = scmp.ne.s32.totalorder %s150, %s151
      %p162 = scmp.eq.s32.totalorder %s28, 0
      %p163 = por %p161, %p162
      %p164 = scmp.ne.s32.totalorder %s150, %s151
      %p165 = scmp.eq.s32.totalorder %s29, 3
      %p166 = por %p164, %p165
      %p168 = scmp.ne.s32.totalorder %s151, %s167
      %p169 = scmp.eq.s32.totalorder %s29, 0
      %p170 = por %p168, %p169
      %s171 = ssub.s32 %s30, %s42
      %s172 = ssub.s32 %s31, %s38
      %s173 = sor.u32 %s171, %s172
      %p174 = scmp.eq.s32.totalorder %s173, 0
      %s176 = sadd.s32 %s175, 1
      %s177 = scalar_select %p174, %s175, %s176
      %p180 = pneg %p174
      %p181 = scmp.eq.s32.totalorder %s23, 3
      %p182 = por %p180, %p181
      %p183 = scmp.ne.s32.totalorder %s175, %s178
      %p184 = scmp.eq.s32.totalorder %s23, 0
      %p185 = por %p183, %p184
      %p186 = scmp.ne.s32.totalorder %s175, %s178
      %p187 = scmp.eq.s32.totalorder %s28, 3
      %p188 = por %p186, %p187
      %p189 = scmp.ne.s32.totalorder %s178, %s179
      %p190 = scmp.eq.s32.totalorder %s28, 0
      %p191 = por %p189, %p190
      %p192 = scmp.ne.s32.totalorder %s178, %s179
      %p193 = scmp.eq.s32.totalorder %s29, 3
      %p194 = por %p192, %p193
      %p196 = scmp.ne.s32.totalorder %s179, %s195
      %p197 = scmp.eq.s32.totalorder %s29, 0
      %p198 = por %p196, %p197
      %p199 = scmp.le.s32.totalorder 1, %s23
      %p200 = scmp.lt.s32.totalorder %s23, 5
      %p201 = pnand %p199, %p200
      %p202 = pneg %p201
      // Predicated region
      $region9: #{tpu_custom_call.1} parent=5 // pred_check
        _
      $region10: #{tpu_custom_call.1} parent=5 // pred_check_branch
        %204 = sbr.rel (%p201) target = $region12
      $region11: #{tpu_custom_call.1} parent=5 // pred_region
        %s205 = ssub.s32 %s23, 1
      $region12: #{tpu_custom_call.1} parent=5 // pred_fallthru
        _
      %p206 = scmp.lt.s32.totalorder %s23, 4
      // Predicated region
      $region13: #{tpu_custom_call.1} parent=5 // pred_check
        %p207 = pneg %p206
      $region14: #{tpu_custom_call.1} parent=5 // pred_check_branch
        %209 = sbr.rel (%p207) target = $region16
      $region15: #{tpu_custom_call.1} parent=5 // pred_region
        // Predicated region
        $region17: #{tpu_custom_call.1} parent=15 // pred_check
          %p210 = pneg %p57
        $region18: #{tpu_custom_call.1} parent=15 // pred_check_branch
          %212 = sbr.rel (%p210) target = $region20
        $region19: #{tpu_custom_call.1} parent=15 // pred_region
          %s213 = sand.u32 %s47, 1
          %s214 = scalar_lea.sflag [#allocation3], %s213
          %s215 = sand.u32 %s47, 1
          %s216 = smul.addr %s215, 16
          %s217 = scalar_lea.vmem [#allocation2], %s216
          %s218 = smul.u32 2, %s31
          %s220 = ssub.s32 256, 256
          %221 = vsyncadd %s214, %s220
          %s222 = smul.addr %s30, 2
          %s223 = sadd.s32 %s218, %s222
          %s224 = smul.addr %s223, 128
          %s225 = scalar_lea.hbm %s0, %s224
          %s226 = sshll.u32 %s217, 4
          %s227 = int_to_ptr.vmem [resolvable:$true] %s226
          %232 = dma.hbm_to_vmem [thread:$0]  %s225, 256, %s227, %s214, 128, 128, 8
        $region20: #{tpu_custom_call.1} parent=15 // pred_fallthru
          _
        // Predicated region
        $region21: #{tpu_custom_call.1} parent=15 // pred_check
          %p233 = pneg %p93
        $region22: #{tpu_custom_call.1} parent=15 // pred_check_branch
          %235 = sbr.rel (%p233) target = $region24
        $region23: #{tpu_custom_call.1} parent=15 // pred_region
          %s236 = sand.u32 %s23, 1
          %s237 = scalar_lea.sflag [#allocation6], %s236
          %s238 = sand.u32 %s83, 1
          %s239 = smul.addr %s238, 8
          %s240 = scalar_lea.vmem [#allocation5], %s239
          %s241 = smul.u32 %s31, 2
          %s242 = ssub.s32 %s241, 1
          %p243 = scmp.gt.s32.totalorder %s242, 0
          %s244 = scalar_select %p243, %s242, 0
          %s246 = ssub.s32 128, 128
          %247 = vsyncadd %s237, %s246
          %s248 = smul.addr %s30, 2
          %s249 = sadd.s32 %s244, %s248
          %s250 = smul.addr %s249, 128
          %s251 = scalar_lea.hbm %s1, %s250
          %s253 = sshll.u32 %s240, 4
          %s254 = int_to_ptr.vmem [resolvable:$true] %s253
          %256 = dma.hbm_to_vmem [thread:$0]  %s251, 128, %s254, %s237
        $region24: #{tpu_custom_call.1} parent=15 // pred_fallthru
          _
        // Predicated region
        $region25: #{tpu_custom_call.1} parent=15 // pred_check
          %p257 = pneg %p129
        $region26: #{tpu_custom_call.1} parent=15 // pred_check_branch
          %259 = sbr.rel (%p257) target = $region28
        $region27: #{tpu_custom_call.1} parent=15 // pred_region
          %s260 = sand.u32 %s23, 1
          %s261 = scalar_lea.sflag [#allocation6], %s260
          %s262 = sand.u32 %s119, 1
          %s263 = smul.addr %s262, 8
          %s264 = scalar_lea.vmem [#allocation7], %s263
          %s265 = sadd.s32 %s31, 1
          %s266 = smul.u32 %s265, 2
          %p267 = scmp.lt.s32.totalorder %s266, 1
          %s268 = scalar_select %p267, %s266, 1
          %s270 = ssub.s32 128, 128
          %271 = vsyncadd %s261, %s270
          %s272 = smul.addr %s30, 2
          %s273 = sadd.s32 %s268, %s272
          %s274 = smul.addr %s273, 128
          %s275 = scalar_lea.hbm %s2, %s274
          %s277 = sshll.u32 %s264, 4
          %s278 = int_to_ptr.vmem [resolvable:$true] %s277
          %280 = dma.hbm_to_vmem [thread:$0]  %s275, 128, %s278, %s261
        $region28: #{tpu_custom_call.1} parent=15 // pred_fallthru
          _
      $region16: #{tpu_custom_call.1} parent=5 // pred_fallthru
        _
      %p281 = scmp.le.s32.totalorder 1, %s23
      %p282 = scmp.lt.s32.totalorder %s23, 5
      %p283 = pnand %p281, %p282
      %p284 = pneg %p283
      // Predicated region
      $region29: #{tpu_custom_call.1} parent=5 // pred_check
        _
      $region30: #{tpu_custom_call.1} parent=5 // pred_check_branch
        %286 = sbr.rel (%p283) target = $region32
      $region31: #{tpu_custom_call.1} parent=5 // pred_region
        %s287 = ssub.s32 %s23, 1
        %s288 = sand.u32 %s50, 1
        %s289 = scalar_lea.sflag [#allocation3], %s288
        %s290 = sand.u32 %s50, 1
        %s291 = smul.addr %s290, 16
        %s292 = scalar_lea.vmem [#allocation2], %s291
        // Predicated region
        $region33: #{tpu_custom_call.1} parent=31 // pred_check
          %p293 = pneg %p63
        $region34: #{tpu_custom_call.1} parent=31 // pred_check_branch
          %295 = sbr.rel (%p293) target = $region36
        $region35: #{tpu_custom_call.1} parent=31 // pred_region
          %296 = dma.done %s289, 256
        $region36: #{tpu_custom_call.1} parent=31 // pred_fallthru
          _
        %s297 = sand.u32 %s28, 1
        %s298 = scalar_lea.sflag [#allocation6], %s297
        %s299 = sand.u32 %s86, 1
        %s300 = smul.addr %s299, 8
        %s301 = scalar_lea.vmem [#allocation5], %s300
        // Predicated region
        $region37: #{tpu_custom_call.1} parent=31 // pred_check
          %p302 = pneg %p99
        $region38: #{tpu_custom_call.1} parent=31 // pred_check_branch
          %304 = sbr.rel (%p302) target = $region40
        $region39: #{tpu_custom_call.1} parent=31 // pred_region
          %305 = dma.done %s298, 128
        $region40: #{tpu_custom_call.1} parent=31 // pred_fallthru
          _
        %s306 = sand.u32 %s28, 1
        %s307 = scalar_lea.sflag [#allocation6], %s306
        %s308 = sand.u32 %s122, 1
        %s309 = smul.addr %s308, 8
        %s310 = scalar_lea.vmem [#allocation7], %s309
        // Predicated region
        $region41: #{tpu_custom_call.1} parent=31 // pred_check
          %p311 = pneg %p135
        $region42: #{tpu_custom_call.1} parent=31 // pred_check_branch
          %313 = sbr.rel (%p311) target = $region44
        $region43: #{tpu_custom_call.1} parent=31 // pred_region
          %314 = dma.done %s307, 128
        $region44: #{tpu_custom_call.1} parent=31 // pred_fallthru
          _
        %s315 = sand.u32 %s50, 1
        %s316 = scalar_lea.sflag [#allocation3], %s315
        %s317 = sand.u32 %s50, 1
        %s318 = smul.addr %s317, 16
        %s319 = scalar_lea.vmem [#allocation2], %s318
        %p320 = pneg %p63
        %p321 = pneg %p60
        %s322 = sand.u32 %s28, 1
        %s323 = scalar_lea.sflag [#allocation6], %s322
        %s324 = sand.u32 %s86, 1
        %s325 = smul.addr %s324, 8
        %s326 = scalar_lea.vmem [#allocation5], %s325
        %p327 = pneg %p99
        %p328 = pneg %p96
        %s329 = sand.u32 %s28, 1
        %s330 = scalar_lea.sflag [#allocation6], %s329
        %s331 = sand.u32 %s122, 1
        %s332 = smul.addr %s331, 8
        %s333 = scalar_lea.vmem [#allocation7], %s332
        %p334 = pneg %p135
        %p335 = pneg %p132
        %p336 = pneg %p163
        %p337 = pneg %p160
        %s338 = sand.u32 %s150, 1
        %s339 = scalar_lea.sflag [#allocation4], %s338
        %s340 = sand.u32 %s150, 1
        %s341 = smul.addr %s340, 16
        %s342 = scalar_lea.vmem [#allocation8], %s341
        %p343 = pneg %p191
        %p344 = pneg %p188
        %s345 = sand.u32 %s178, 1
        %s346 = scalar_lea.sflag [#allocation10], %s345
        %s347 = sand.u32 %s178, 1
        %s348 = smul.addr %s347, 16
        %s349 = scalar_lea.vmem [#allocation9], %s348
        %s350 = smul.u32 2, %s33
        %s351 = smul.u32 %s33, 2
        %s352 = ssub.s32 %s351, 1
        %p353 = scmp.gt.s32.totalorder %s352, 0
        %s354 = scalar_select %p353, %s352, 0
        %s355 = sadd.s32 %s33, 1
        %s356 = smul.u32 %s355, 2
        %p357 = scmp.lt.s32.totalorder %s356, 1
        %s358 = scalar_select %p357, %s356, 1
        %s359 = smul.u32 2, %s33
        %s360 = smul.u32 2, %s33
        %v361 = vld [vmem:[%s292] sm:$0xff]
        %v362 = vld [vmem:[%s292 + $0x8] sm:$0xff]
        %v363 = vlaneseq
        %v364 = vand.u32 %v363, 127
        %365 = vrot.lane.b32.xlu0 %v361, 1
        %v366 = vpop.permute.xlu0 %365
        %367 = vrot.lane.b32.xlu0 %v362, 1
        %v368 = vpop.permute.xlu0 %367
        %369 = vrot.lane.b32.xlu0 %v364, 1
        %v370 = vpop.permute.xlu0 %369
        %v371 = vsub.s32 %v370, %v364
        %vm372 = vcmp.ge.s32.totalorder %v371, 4294967294
        %vm373 = vcmp.le.s32.totalorder %v371, 2
        %vm374 = vmand %vm372, %vm373
        %v375 = vsel %vm374, %v366, 0.0
        %v376 = vsel %vm374, %v368, 0.0
        %377 = vrot.lane.b32.xlu0 %v361, 127
        %v378 = vpop.permute.xlu0 %377
        %379 = vrot.lane.b32.xlu0 %v362, 127
        %v380 = vpop.permute.xlu0 %379
        %381 = vrot.lane.b32.xlu0 %v364, 127
        %v382 = vpop.permute.xlu0 %381
        %v383 = vsub.s32 %v382, %v364
        %vm384 = vcmp.ge.s32.totalorder %v383, 4294967294
        %vm385 = vcmp.le.s32.totalorder %v383, 2
        %vm386 = vmand %vm384, %vm385
        %v387 = vsel %vm386, %v378, 0.0
        %v388 = vsel %vm386, %v380, 0.0
        %389 = vrot.lane.b32.xlu0 %v361, 2
        %v390 = vpop.permute.xlu0 %389
        %391 = vrot.lane.b32.xlu0 %v362, 2
        %v392 = vpop.permute.xlu0 %391
        %393 = vrot.lane.b32.xlu0 %v364, 2
        %v394 = vpop.permute.xlu0 %393
        %v395 = vsub.s32 %v394, %v364
        %vm396 = vcmp.ge.s32.totalorder %v395, 4294967294
        %vm397 = vcmp.le.s32.totalorder %v395, 2
        %vm398 = vmand %vm396, %vm397
        %v399 = vsel %vm398, %v390, 0.0
        %v400 = vsel %vm398, %v392, 0.0
        %401 = vrot.lane.b32.xlu0 %v361, 126
        %v402 = vpop.permute.xlu0 %401
        %403 = vrot.lane.b32.xlu0 %v362, 126
        %v404 = vpop.permute.xlu0 %403
        %405 = vrot.lane.b32.xlu0 %v364, 126
        %v406 = vpop.permute.xlu0 %405
        %v407 = vsub.s32 %v406, %v364
        %vm408 = vcmp.ge.s32.totalorder %v407, 4294967294
        %vm409 = vcmp.le.s32.totalorder %v407, 2
        %vm410 = vmand %vm408, %vm409
        %v411 = vsel %vm410, %v402, 0.0
        %v412 = vsel %vm410, %v404, 0.0
        %v413 = vmin.f32 %v361, %v375
        %v414 = vmin.f32 %v362, %v376
        %v415 = vmax.f32 %v361, %v375
        %v416 = vmax.f32 %v362, %v376
        %v417 = vmin.f32 %v399, %v411
        %v418 = vmin.f32 %v400, %v412
        %v419 = vmax.f32 %v399, %v411
        %v420 = vmax.f32 %v400, %v412
        %v421 = vmax.f32 %v413, %v417
        %v422 = vmax.f32 %v414, %v418
        %v423 = vmin.f32 %v415, %v419
        %v424 = vmin.f32 %v416, %v420
        %v425 = vmin.f32 %v423, %v387
        %v426 = vmin.f32 %v424, %v388
        %v427 = vmax.f32 %v423, %v387
        %v428 = vmax.f32 %v424, %v388
        %v429 = vmin.f32 %v427, %v421
        %v430 = vmin.f32 %v428, %v422
        %v431 = vmax.f32 %v425, %v429
        %v432 = vmax.f32 %v426, %v430
        %v433 = vld [vmem:[%s301] sm:$0xff]
        %p434 = scmp.gt.s32.totalorder %s33, 0
        %s435 = scalar_select %p434, 1, 0
        %s436 = scvt.s32.f32 %s435
        %v437 = vstv %s436
        %v438 = vmul.f32 %v433, %v437
        %v439 = vld [vmem:[%s310] sm:$0xff]
        %p440 = scmp.lt.s32.totalorder %s33, 0
        %s441 = scalar_select %p440, 1, 0
        %s442 = scvt.s32.f32 %s441
        %v443 = vstv %s442
        %v444 = vmul.f32 %v439, %v443
        %vm448 = vcmask 1046528
        %v449 = vrot.slane %v438, 1
        %v450 = vrot.slane %v361, 1
        %v451 = vsel %vm448, %v449, %v450
        %v452 = vrot.slane %v362, 1
        %v453 = vsel %vm448, %v450, %v452
        %v457 = vmin.f32 %v438, %v451
        %v458 = vmin.f32 %v361, %v453
        %v459 = vmin.f32 %v362, %v452
        %v460 = vmax.f32 %v438, %v451
        %v461 = vmax.f32 %v361, %v453
        %v462 = vmax.f32 %v362, %v452
        %v464 = vrot.slane %v444, 1
        %v465 = vsel %vm448, %v452, %v464
        %v468 = vmin.f32 %v362, %v465
        %v469 = vmin.f32 %v444, %v464
        %v470 = vmax.f32 %v362, %v465
        %v471 = vmax.f32 %v444, %v464
        %vm475 = vcmask 1044480
        %v476 = vrot.slane %v458, 3
        %v477 = vrot.slane %v468, 3
        %v478 = vsel %vm475, %v476, %v477
        %v479 = vrot.slane %v469, 3
        %v480 = vsel %vm475, %v477, %v479
        %v484 = vmax.f32 %v457, %v476
        %v485 = vmax.f32 %v458, %v478
        %v486 = vmax.f32 %v459, %v480
        %v490 = vrot.slane %v461, 3
        %v491 = vrot.slane %v470, 3
        %v492 = vsel %vm475, %v490, %v491
        %v493 = vrot.slane %v471, 3
        %v494 = vsel %vm475, %v491, %v493
        %v498 = vmin.f32 %v460, %v490
        %v499 = vmin.f32 %v461, %v492
        %v500 = vmin.f32 %v462, %v494
        %vm501 = vcmask 1045504
        %v502 = vrot.slane %v361, 2
        %v503 = vrot.slane %v362, 2
        %v504 = vsel %vm501, %v502, %v503
        %v508 = vmin.f32 %v498, %v502
        %v509 = vmin.f32 %v499, %v504
        %v510 = vmin.f32 %v500, %v503
        %v511 = vmax.f32 %v498, %v502
        %v512 = vmax.f32 %v499, %v504
        %v513 = vmax.f32 %v500, %v503
        %v514 = vmin.f32 %v511, %v484
        %v515 = vmin.f32 %v512, %v485
        %v516 = vmin.f32 %v513, %v486
        %v517 = vmax.f32 %v508, %v514
        %v518 = vmax.f32 %v509, %v515
        %v519 = vmax.f32 %v510, %v516
        %vm523 = vcmask 1041408
        %v524 = vrot.slane %v517, 6
        %v525 = vrot.slane %v518, 6
        %v526 = vsel %vm523, %v524, %v525
        %v527 = vrot.slane %v519, 6
        %v528 = vsel %vm523, %v525, %v527
        %v531 = vmax.f32 %v431, %v526
        %v532 = vmax.f32 %v432, %v528
        %vm533 = vcmp.lt.f32.partialorder %v531, 1.1754944e-38
        %vm534 = vcmp.lt.f32.partialorder %v532, 1.1754944e-38
        %v535 = vsel %vm533, 1.0, %v531
        %v536 = vsel %vm534, 1.0, %v532
        %v537 = vrcp.pop %v535
        %v538 = vmul.f32 1.0, %v537
        %v539 = vrcp.pop %v536
        %v540 = vmul.f32 1.0, %v539
        %v541 = vmul.f32 %v431, %v538
        %v542 = vmul.f32 %v432, %v540
        %v543 = vmul.f32 %v541, %v541
        %v544 = vmul.f32 %v542, %v542
        %v547 = vrot.slane %v538, 2
        %v548 = vrot.slane %v540, 2
        %v549 = vsel %vm501, %v547, %v548
        %v553 = vmul.f32 %v517, %v547
        %v554 = vmul.f32 %v518, %v549
        %v555 = vmul.f32 %v519, %v548
        %v556 = vmul.f32 %v553, %v553
        %v557 = vmul.f32 %v554, %v554
        %v558 = vmul.f32 %v555, %v555
        %v562 = vrot.slane %v556, 6
        %v563 = vrot.slane %v557, 6
        %v564 = vsel %vm523, %v562, %v563
        %v565 = vrot.slane %v558, 6
        %v566 = vsel %vm523, %v563, %v565
        %v569 = vadd.f32 %v543, %v564
        %v570 = vadd.f32 %v544, %v566
        %v571 = vrcp.pop %v569
        %v572 = vmul.f32 1.0, %v571
        %v573 = vrcp.pop %v570
        %v574 = vmul.f32 1.0, %v573
        %v575 = vmul.f32 %v543, %v572
        %v576 = vmul.f32 %v544, %v574
        %v577 = vmul.f32 %v361, %v575
        %v578 = vmul.f32 %v362, %v576
        %v579 = vsub.f32 %v361, %v577
        %v580 = vsub.f32 %v362, %v578
        %581 = vst [vmem:[%s342] sm:$0xff] %v577
        %582 = vst [vmem:[%s342 + $0x8] sm:$0xff] %v578
        %583 = vst [vmem:[%s349] sm:$0xff] %v579
        %584 = vst [vmem:[%s349 + $0x8] sm:$0xff] %v580
        %s585 = sand.u32 %s150, 1
        %s586 = scalar_lea.sflag [#allocation4], %s585
        %s587 = sand.u32 %s150, 1
        %s588 = smul.addr %s587, 16
        %s589 = scalar_lea.vmem [#allocation8], %s588
        %s590 = sand.u32 %s178, 1
        %s591 = scalar_lea.sflag [#allocation10], %s590
        %s592 = sand.u32 %s178, 1
        %s593 = smul.addr %s592, 16
        %s594 = scalar_lea.vmem [#allocation9], %s593
        // Predicated region
        $region45: #{tpu_custom_call.1} parent=31 // pred_check
          %p595 = pneg %p160
        $region46: #{tpu_custom_call.1} parent=31 // pred_check_branch
          %597 = sbr.rel (%p595) target = $region48
        $region47: #{tpu_custom_call.1} parent=31 // pred_region
          %s598 = smul.u32 2, %s33
          %s600 = ssub.s32 256, 256
          %601 = vsyncadd %s586, %s600
          %s602 = smul.addr %s32, 2
          %s603 = sadd.s32 %s598, %s602
          %s604 = smul.addr %s603, 128
          %s605 = scalar_lea.hbm %s3, %s604
          %s606 = sshll.u32 %s589, 4
          %s607 = int_to_ptr.vmem [resolvable:$true] %s606
          %612 = dma.vmem_to_hbm [thread:$0]  %s607, 256, %s605, %s586, 128, 128, 8
        $region48: #{tpu_custom_call.1} parent=31 // pred_fallthru
          _
        // Predicated region
        $region49: #{tpu_custom_call.1} parent=31 // pred_check
          %p613 = pneg %p188
        $region50: #{tpu_custom_call.1} parent=31 // pred_check_branch
          %615 = sbr.rel (%p613) target = $region52
        $region51: #{tpu_custom_call.1} parent=31 // pred_region
          %s616 = smul.u32 2, %s33
          %s618 = ssub.s32 256, 256
          %619 = vsyncadd %s591, %s618
          %s620 = smul.addr %s32, 2
          %s621 = sadd.s32 %s616, %s620
          %s622 = smul.addr %s621, 128
          %s623 = scalar_lea.hbm %s4, %s622
          %s624 = sshll.u32 %s594, 4
          %s625 = int_to_ptr.vmem [resolvable:$true] %s624
          %630 = dma.vmem_to_hbm [thread:$0]  %s625, 256, %s623, %s591, 128, 128, 8
        $region52: #{tpu_custom_call.1} parent=31 // pred_fallthru
          _
      $region32: #{tpu_custom_call.1} parent=5 // pred_fallthru
        _
      %p631 = scmp.le.s32.totalorder 2, %s23
      // Predicated region
      $region53: #{tpu_custom_call.1} parent=5 // pred_check
        %p632 = pneg %p631
      $region54: #{tpu_custom_call.1} parent=5 // pred_check_branch
        %634 = sbr.rel (%p632) target = $region56
      $region55: #{tpu_custom_call.1} parent=5 // pred_region
        %s635 = ssub.s32 %s23, 2
        // Predicated region
        $region57: #{tpu_custom_call.1} parent=55 // pred_check
          %p636 = pneg %p166
        $region58: #{tpu_custom_call.1} parent=55 // pred_check_branch
          %638 = sbr.rel (%p636) target = $region60
        $region59: #{tpu_custom_call.1} parent=55 // pred_region
          %s639 = sand.u32 %s151, 1
          %s640 = scalar_lea.sflag [#allocation4], %s639
          %s641 = sand.u32 %s151, 1
          %s642 = smul.addr %s641, 16
          %s643 = scalar_lea.vmem [#allocation8], %s642
          %644 = dma.done %s640, 256
        $region60: #{tpu_custom_call.1} parent=55 // pred_fallthru
          _
        // Predicated region
        $region61: #{tpu_custom_call.1} parent=55 // pred_check
          %p645 = pneg %p194
        $region62: #{tpu_custom_call.1} parent=55 // pred_check_branch
          %647 = sbr.rel (%p645) target = $region64
        $region63: #{tpu_custom_call.1} parent=55 // pred_region
          %s648 = sand.u32 %s179, 1
          %s649 = scalar_lea.sflag [#allocation10], %s648
          %s650 = sand.u32 %s179, 1
          %s651 = smul.addr %s650, 16
          %s652 = scalar_lea.vmem [#allocation9], %s651
          %653 = dma.done %s649, 256
        $region64: #{tpu_custom_call.1} parent=55 // pred_fallthru
          _
      $region56: #{tpu_custom_call.1} parent=5 // pred_fallthru
        _
    $region6: #{tpu_custom_call.1} parent=1 // loop_footer
      %s27 = sadd.s32 1, %s23
    $region7: #{tpu_custom_call.1} parent=1 // loop_footer_branch
      %22 = sbr.rel target = $region3
    $region8: #{tpu_custom_call.1} parent=1 // loop_exit
      _
    %654 = vsyncpa [#allocation3], 1
    %s655 = scalar_lea.sflag [#allocation3], 1
    %656 = vsyncpa %s655, 1
    %657 = vsyncpa [#allocation6], 1
    %s658 = scalar_lea.sflag [#allocation6], 1
    %659 = vsyncpa %s658, 1
    %660 = vsyncpa [#allocation4], 1
    %s661 = scalar_lea.sflag [#allocation4], 1
    %662 = vsyncpa %s661, 1
    %663 = vsyncpa [#allocation10], 1
    %s664 = scalar_lea.sflag [#allocation10], 1
    %665 = vsyncpa %s664, 1

</llo_original>
